<compile_context>
chip_gen: v7x
topology: tpu7x:2x2x1
jax: 0.10.0
libtpu: 0.0.40
codegen_flags: <defaults>
</compile_context>

<pallas_src>
import jax
import jax.numpy as jnp
from jax.experimental import pallas as pl
from jax.experimental.pallas import tpu as pltpu

EPS = 1e-5  # nn.InstanceNorm2d default eps, affine=False


def _make_kernel(H, W):
    HW = H * W
    inv_hw = 1.0 / float(HW)

    def kernel(x_ref, w1_ref, w2_ref, o_ref):
        C = x_ref.shape[1]
        x = x_ref[0]                                    # (C, HW) float32

        # Lane-only reflect masks for the column boundaries (broadcast over C).
        pos = jax.lax.broadcasted_iota(jnp.int32, (1, HW), 1)
        col = pos % W
        col_first = col == 0                            # j == 0
        col_last = col == W - 1                         # j == W-1

        def row_prev(v):
            # value at row i-1, reflect i=0 -> i=1   (row 1, then rows 0..H-2)
            return jnp.concatenate([v[:, W:2 * W], v[:, :HW - W]], axis=1)

        def row_next(v):
            # value at row i+1, reflect i=H-1 -> i=H-2  (rows 1..H-1, then row H-2)
            return jnp.concatenate([v[:, W:], v[:, (H - 2) * W:(H - 1) * W]], axis=1)

        def conv3x3(t_f32, w_ref):
            # t_f32: (C, HW) f32.  Build the 9 reflect taps in the compute dtype,
            # grouped by kh into three (3C, HW) slabs, and accumulate three
            # (C,3C)x(3C,HW) MXU matmuls in f32.
            t = t_f32.astype(w_ref.dtype)
            # Column shifts on the flat lane axis; wrap positions are overridden
            # by the reflect selects so their contents never matter.
            left = jnp.concatenate([t[:, 1:], t[:, HW - 1:]], axis=1)    # [p]=t[p+1]
            right = jnp.concatenate([t[:, :1], t[:, :HW - 1]], axis=1)   # [p]=t[p-1]
            h = (
                jnp.where(col_first, left, right),      # kw=0: col j-1, reflect j=0 -> 1
                t,                                      # kw=1: col j
                jnp.where(col_last, right, left),       # kw=2: col j+1, reflect j=W-1 -> W-2
            )
            g0 = jnp.concatenate([row_prev(v) for v in h], axis=0)   # kh=0 taps (3C, HW)
            g1 = jnp.concatenate(list(h), axis=0)                    # kh=1 taps (3C, HW)
            g2 = jnp.concatenate([row_next(v) for v in h], axis=0)   # kh=2 taps (3C, HW)
            acc = jnp.dot(w_ref[0], g0, preferred_element_type=jnp.float32)
            acc = acc + jnp.dot(w_ref[1], g1, preferred_element_type=jnp.float32)
            acc = acc + jnp.dot(w_ref[2], g2, preferred_element_type=jnp.float32)
            return acc                                  # (C, HW) f32

        def instance_norm(t, relu):
            # Mean-subtract-then-square (no E[x^2]-E[x]^2 cancellation), no affine.
            m = jnp.sum(t, axis=1, keepdims=True) * inv_hw
            d = t - m
            v = jnp.sum(d * d, axis=1, keepdims=True) * inv_hw
            y = d * jax.lax.rsqrt(v + EPS)
            return jnp.maximum(y, 0.0) if relu else y

        h1 = instance_norm(conv3x3(x, w1_ref), relu=True)
        y = instance_norm(conv3x3(h1, w2_ref), relu=False)
        o_ref[0] = (x + y).astype(o_ref.dtype)

    return kernel


def residual_block(x, w1, b1, w2, b2, *, compute_dtype=jnp.bfloat16):
    """Pallas forward of ResidualBlock.  b1/b2 are accepted for API parity but are
    mathematically cancelled by InstanceNorm(affine=False), so they are unused."""
    del b1, b2
    N, C, H, W = x.shape
    assert H >= 2 and W >= 2, "reflect padding needs H, W >= 2"
    HW = H * W

    # Lane-dense activations: (N, C, H*W).
    x2 = x.reshape(N, C, HW)

    # im2col weights grouped by kh: OIHW -> (3, C_out, 3*C_in), where the last axis
    # is kw-major / c_in-minor:  w_r[kh, c_out, kw*C + c_in] = w[c_out, c_in, kh, kw].
    def reshape_w(w):
        return jnp.transpose(w, (2, 0, 3, 1)).reshape(3, C, 3 * C).astype(compute_dtype)

    w1r = reshape_w(w1)
    w2r = reshape_w(w2)

    # Derive a VMEM budget from the actual block/temp sizes (double-buffered I/O
    # blocks + weights + in-kernel tap/accumulator temps), clamped to [32, 100] MiB.
    cd = jnp.dtype(compute_dtype).itemsize
    xd = jnp.dtype(x.dtype).itemsize
    per_step = (
        2 * (2 * C * HW * xd)         # x block + out block, double-buffered
        + 2 * (2 * 9 * C * C * cd)    # w1 + w2 (3,C,3C), double-buffered
        + 14 * C * HW * cd            # compute-dtype tap temps (h, shifts, 3C group)
        + 6 * C * HW * 4              # f32 conv accumulators / IN temps / h1 / y
    )
    vmem_limit = int(min(max(2 * per_step, 32 * 1024 * 1024), 100 * 1024 * 1024))

    out = pl.pallas_call(
        _make_kernel(H, W),
        out_shape=jax.ShapeDtypeStruct((N, C, HW), x.dtype),
        grid_spec=pltpu.PrefetchScalarGridSpec(
            num_scalar_prefetch=0,
            grid=(N,),
            in_specs=[
                pl.BlockSpec((1, C, HW), lambda n: (n, 0, 0)),
                pl.BlockSpec((3, C, 3 * C), lambda n: (0, 0, 0)),
                pl.BlockSpec((3, C, 3 * C), lambda n: (0, 0, 0)),
            ],
            out_specs=pl.BlockSpec((1, C, HW), lambda n: (n, 0, 0)),
        ),
        compiler_params=pltpu.CompilerParams(
            dimension_semantics=("parallel",),
            vmem_limit_bytes=vmem_limit,
        ),
    )(x2, w1r, w2r)
    return out.reshape(N, C, H, W)


def ref_forward(x, w1, b1, w2, b2):
    # Pure-JAX reference (faithful to the PyTorch module, including the biases,
    # which the InstanceNorm cancels).
    def conv(t, w, b):
        tp = jnp.pad(t, ((0, 0), (0, 0), (1, 1), (1, 1)), mode="reflect")
        y = jax.lax.conv_general_dilated(
            tp, w, (1, 1), "VALID", dimension_numbers=("NCHW", "OIHW", "NCHW"))
        return y + b[None, :, None, None]

    def inorm(t):
        m = t.mean(axis=(2, 3), keepdims=True)
        v = ((t - m) ** 2).mean(axis=(2, 3), keepdims=True)
        return (t - m) / jnp.sqrt(v + EPS)

    h = jax.nn.relu(inorm(conv(x, w1, b1)))
    y = inorm(conv(h, w2, b2))
    return x + y


if __name__ == "__main__":
    N, C, H, W = 2, 4, 16, 16
    key = jax.random.PRNGKey(0)
    kx, kw1, kb1, kw2, kb2 = jax.random.split(key, 5)

    x = jax.random.normal(kx, (N, C, H, W), jnp.float32)
    # deterministic synthetic params (Conv2d(in=C, out=C, k=3) shapes)
    w1 = jax.random.normal(kw1, (C, C, 3, 3), jnp.float32) * 0.1
    b1 = jax.random.normal(kb1, (C,), jnp.float32) * 0.1
    w2 = jax.random.normal(kw2, (C, C, 3, 3), jnp.float32) * 0.1
    b2 = jax.random.normal(kb2, (C,), jnp.float32) * 0.1

    ref = jax.block_until_ready(ref_forward(x, w1, b1, w2, b2))

    # Structural-correctness check with f32 MXU operands: tight enough to catch any
    # tap / reflect / weight-layout bug, loose enough for TPU matmul precision modes.
    out_f32 = jax.block_until_ready(
        residual_block(x, w1, b1, w2, b2, compute_dtype=jnp.float32))
    assert out_f32.shape == (N, C, H, W)
    assert jnp.allclose(out_f32, ref, rtol=1e-2, atol=1e-2), float(
        jnp.max(jnp.abs(out_f32 - ref)))

    # Fast path: bf16 MXU operands with f32 accumulation.
    out_bf16 = jax.block_until_ready(residual_block(x, w1, b1, w2, b2))
    assert out_bf16.shape == (N, C, H, W)
    assert jnp.allclose(out_bf16, ref, rtol=1e-1, atol=1e-1)

    print("KERNEL_OK")
</pallas_src>

<mosaic_0001>
module attributes {stable_mosaic.version = 11 : i64} {
  func.func @kernel(%arg0: i32, %arg1: memref<1x4x256xf32, #tpu.memory_space<vmem>>, %arg2: memref<3x4x12xf32, #tpu.memory_space<vmem>>, %arg3: memref<3x4x12xf32, #tpu.memory_space<vmem>>, %arg4: memref<1x4x256xf32, #tpu.memory_space<vmem>>) attributes {dimension_semantics = [#tpu.dimension_semantics<parallel>], iteration_bounds = array<i64: 2>, scalar_prefetch = 0 : i64, scratch_operands = 0 : i64, tpu.core_type = #tpu.core_type<tc>, window_params = [{transform_indices = @transform_0, window_bounds = array<i64: 1, 4, 256>}, {pipeline_mode = #tpu.pipeline_mode<synchronous>, transform_indices = @transform_1, window_bounds = array<i64: 3, 4, 12>}, {pipeline_mode = #tpu.pipeline_mode<synchronous>, transform_indices = @transform_2, window_bounds = array<i64: 3, 4, 12>}, {transform_indices = @transform_3, window_bounds = array<i64: 1, 4, 256>}]} {
    %c0 = arith.constant 0 : index
    %c0_0 = arith.constant 0 : index
    %c0_1 = arith.constant 0 : index
    %0 = vector.load %arg1[%c0, %c0_0, %c0_1] : memref<1x4x256xf32, #tpu.memory_space<vmem>>, vector<1x4x256xf32>
    %1 = vector.shape_cast %0 : vector<1x4x256xf32> to vector<4x256xf32>
    %2 = tpu.iota {dimensions = array<i32: 1>} : vector<1x256xi32>
    %c16_i32 = arith.constant 16 : i32
    %c0_i32 = arith.constant 0 : i32
    %3 = arith.cmpi eq, %c16_i32, %c0_i32 : i32
    %c1_i32 = arith.constant 1 : i32
    %4 = arith.select %3, %c1_i32, %c16_i32 : i32
    %5 = vector.broadcast %4 : i32 to vector<1x256xi32>
    %6 = arith.remsi %2, %5 : vector<1x256xi32>
    %c0_i32_2 = arith.constant 0 : i32
    %7 = vector.broadcast %c0_i32_2 : i32 to vector<1x256xi32>
    %8 = arith.cmpi ne, %6, %7 : vector<1x256xi32>
    %c0_i32_3 = arith.constant 0 : i32
    %9 = vector.broadcast %c0_i32_3 : i32 to vector<1x256xi32>
    %10 = arith.cmpi slt, %6, %9 : vector<1x256xi32>
    %c0_i32_4 = arith.constant 0 : i32
    %11 = arith.cmpi slt, %4, %c0_i32_4 : i32
    %12 = vector.broadcast %11 : i1 to vector<1x256xi1>
    %13 = vector.broadcast %12 : vector<1x256xi1> to vector<1x256xi1>
    %14 = arith.xori %10, %13 : vector<1x256xi1>
    %15 = arith.andi %14, %8 : vector<1x256xi1>
    %16 = vector.broadcast %4 : i32 to vector<1x256xi32>
    %17 = arith.addi %6, %16 : vector<1x256xi32>
    %18 = arith.select %15, %17, %6 : vector<1x256xi1>, vector<1x256xi32>
    %c0_i32_5 = arith.constant 0 : i32
    %19 = vector.broadcast %c0_i32_5 : i32 to vector<1x256xi32>
    %20 = arith.cmpi eq, %18, %19 : vector<1x256xi32>
    %c15_i32 = arith.constant 15 : i32
    %21 = vector.broadcast %c15_i32 : i32 to vector<1x256xi32>
    %22 = arith.cmpi eq, %18, %21 : vector<1x256xi32>
    %23 = vector.extract_strided_slice %1 {offsets = [0, 1], sizes = [4, 255], strides = [1, 1]} : vector<4x256xf32> to vector<4x255xf32>
    %24 = vector.extract_strided_slice %1 {offsets = [0, 255], sizes = [4, 1], strides = [1, 1]} : vector<4x256xf32> to vector<4x1xf32>
    %25 = tpu.concatenate %23, %24 in 1 : vector<4x255xf32>, vector<4x1xf32> -> vector<4x256xf32>
    %26 = vector.extract_strided_slice %1 {offsets = [0, 0], sizes = [4, 1], strides = [1, 1]} : vector<4x256xf32> to vector<4x1xf32>
    %27 = vector.extract_strided_slice %1 {offsets = [0, 0], sizes = [4, 255], strides = [1, 1]} : vector<4x256xf32> to vector<4x255xf32>
    %28 = tpu.concatenate %26, %27 in 1 : vector<4x1xf32>, vector<4x255xf32> -> vector<4x256xf32>
    %29 = vector.shape_cast %20 : vector<1x256xi1> to vector<1x256xi1>
    %30 = vector.broadcast %29 : vector<1x256xi1> to vector<4x256xi1>
    %31 = arith.select %30, %25, %28 : vector<4x256xi1>, vector<4x256xf32>
    %32 = vector.shape_cast %22 : vector<1x256xi1> to vector<1x256xi1>
    %33 = vector.broadcast %32 : vector<1x256xi1> to vector<4x256xi1>
    %34 = arith.select %33, %28, %25 : vector<4x256xi1>, vector<4x256xf32>
    %35 = vector.extract_strided_slice %31 {offsets = [0, 16], sizes = [4, 16], strides = [1, 1]} : vector<4x256xf32> to vector<4x16xf32>
    %36 = vector.extract_strided_slice %31 {offsets = [0, 0], sizes = [4, 240], strides = [1, 1]} : vector<4x256xf32> to vector<4x240xf32>
    %37 = tpu.concatenate %35, %36 in 1 : vector<4x16xf32>, vector<4x240xf32> -> vector<4x256xf32>
    %38 = vector.extract_strided_slice %1 {offsets = [0, 16], sizes = [4, 16], strides = [1, 1]} : vector<4x256xf32> to vector<4x16xf32>
    %39 = vector.extract_strided_slice %1 {offsets = [0, 0], sizes = [4, 240], strides = [1, 1]} : vector<4x256xf32> to vector<4x240xf32>
    %40 = tpu.concatenate %38, %39 in 1 : vector<4x16xf32>, vector<4x240xf32> -> vector<4x256xf32>
    %41 = vector.extract_strided_slice %34 {offsets = [0, 16], sizes = [4, 16], strides = [1, 1]} : vector<4x256xf32> to vector<4x16xf32>
    %42 = vector.extract_strided_slice %34 {offsets = [0, 0], sizes = [4, 240], strides = [1, 1]} : vector<4x256xf32> to vector<4x240xf32>
    %43 = tpu.concatenate %41, %42 in 1 : vector<4x16xf32>, vector<4x240xf32> -> vector<4x256xf32>
    %44 = tpu.concatenate %37, %40, %43 in 0 : vector<4x256xf32>, vector<4x256xf32>, vector<4x256xf32> -> vector<12x256xf32>
    %45 = tpu.concatenate %31, %1, %34 in 0 : vector<4x256xf32>, vector<4x256xf32>, vector<4x256xf32> -> vector<12x256xf32>
    %46 = vector.extract_strided_slice %31 {offsets = [0, 16], sizes = [4, 240], strides = [1, 1]} : vector<4x256xf32> to vector<4x240xf32>
    %47 = vector.extract_strided_slice %31 {offsets = [0, 224], sizes = [4, 16], strides = [1, 1]} : vector<4x256xf32> to vector<4x16xf32>
    %48 = tpu.concatenate %46, %47 in 1 : vector<4x240xf32>, vector<4x16xf32> -> vector<4x256xf32>
    %49 = vector.extract_strided_slice %1 {offsets = [0, 16], sizes = [4, 240], strides = [1, 1]} : vector<4x256xf32> to vector<4x240xf32>
    %50 = vector.extract_strided_slice %1 {offsets = [0, 224], sizes = [4, 16], strides = [1, 1]} : vector<4x256xf32> to vector<4x16xf32>
    %51 = tpu.concatenate %49, %50 in 1 : vector<4x240xf32>, vector<4x16xf32> -> vector<4x256xf32>
    %52 = vector.extract_strided_slice %34 {offsets = [0, 16], sizes = [4, 240], strides = [1, 1]} : vector<4x256xf32> to vector<4x240xf32>
    %53 = vector.extract_strided_slice %34 {offsets = [0, 224], sizes = [4, 16], strides = [1, 1]} : vector<4x256xf32> to vector<4x16xf32>
    %54 = tpu.concatenate %52, %53 in 1 : vector<4x240xf32>, vector<4x16xf32> -> vector<4x256xf32>
    %55 = tpu.concatenate %48, %51, %54 in 0 : vector<4x256xf32>, vector<4x256xf32>, vector<4x256xf32> -> vector<12x256xf32>
    %c0_6 = arith.constant 0 : index
    %c0_7 = arith.constant 0 : index
    %c0_8 = arith.constant 0 : index
    %56 = vector.load %arg2[%c0_6, %c0_7, %c0_8] : memref<3x4x12xf32, #tpu.memory_space<vmem>>, vector<1x4x12xf32>
    %57 = vector.shape_cast %56 : vector<1x4x12xf32> to vector<4x12xf32>
    %cst = arith.constant dense<0.000000e+00> : vector<4x256xf32>
    %58 = tpu.matmul %57, %44, %cst {dimension_numbers = #tpu.dot_dimension_numbers<[1], [0], [0], [1], [0, 0, 1, 1], [], []>} : vector<4x12xf32>, vector<12x256xf32>, vector<4x256xf32> -> vector<4x256xf32>
    %c1 = arith.constant 1 : index
    %c0_9 = arith.constant 0 : index
    %c0_10 = arith.constant 0 : index
    %59 = vector.load %arg2[%c1, %c0_9, %c0_10] : memref<3x4x12xf32, #tpu.memory_space<vmem>>, vector<1x4x12xf32>
    %60 = vector.shape_cast %59 : vector<1x4x12xf32> to vector<4x12xf32>
    %cst_11 = arith.constant dense<0.000000e+00> : vector<4x256xf32>
    %61 = tpu.matmul %60, %45, %cst_11 {dimension_numbers = #tpu.dot_dimension_numbers<[1], [0], [0], [1], [0, 0, 1, 1], [], []>} : vector<4x12xf32>, vector<12x256xf32>, vector<4x256xf32> -> vector<4x256xf32>
    %62 = arith.addf %58, %61 : vector<4x256xf32>
    %c2 = arith.constant 2 : index
    %c0_12 = arith.constant 0 : index
    %c0_13 = arith.constant 0 : index
    %63 = vector.load %arg2[%c2, %c0_12, %c0_13] : memref<3x4x12xf32, #tpu.memory_space<vmem>>, vector<1x4x12xf32>
    %64 = vector.shape_cast %63 : vector<1x4x12xf32> to vector<4x12xf32>
    %cst_14 = arith.constant dense<0.000000e+00> : vector<4x256xf32>
    %65 = tpu.matmul %64, %55, %cst_14 {dimension_numbers = #tpu.dot_dimension_numbers<[1], [0], [0], [1], [0, 0, 1, 1], [], []>} : vector<4x12xf32>, vector<12x256xf32>, vector<4x256xf32> -> vector<4x256xf32>
    %66 = arith.addf %62, %65 : vector<4x256xf32>
    %cst_15 = arith.constant dense<0.000000e+00> : vector<4xf32>
    %67 = vector.multi_reduction <add>, %66, %cst_15 [1] : vector<4x256xf32> to vector<4xf32>
    %68 = vector.shape_cast %67 : vector<4xf32> to vector<4x1xf32>
    %cst_16 = arith.constant 3.906250e-03 : f32
    %69 = vector.broadcast %cst_16 : f32 to vector<4x1xf32>
    %70 = arith.mulf %68, %69 : vector<4x1xf32>
    %71 = vector.broadcast %70 : vector<4x1xf32> to vector<4x256xf32>
    %72 = arith.subf %66, %71 : vector<4x256xf32>
    %73 = arith.mulf %72, %72 : vector<4x256xf32>
    %cst_17 = arith.constant dense<0.000000e+00> : vector<4xf32>
    %74 = vector.multi_reduction <add>, %73, %cst_17 [1] : vector<4x256xf32> to vector<4xf32>
    %75 = vector.shape_cast %74 : vector<4xf32> to vector<4x1xf32>
    %cst_18 = arith.constant 3.906250e-03 : f32
    %76 = vector.broadcast %cst_18 : f32 to vector<4x1xf32>
    %77 = arith.mulf %75, %76 : vector<4x1xf32>
    %cst_19 = arith.constant 9.99999974E-6 : f32
    %78 = vector.broadcast %cst_19 : f32 to vector<4x1xf32>
    %79 = arith.addf %77, %78 : vector<4x1xf32>
    %80 = math.rsqrt %79 : vector<4x1xf32>
    %81 = vector.broadcast %80 : vector<4x1xf32> to vector<4x256xf32>
    %82 = arith.mulf %72, %81 : vector<4x256xf32>
    %cst_20 = arith.constant 0.000000e+00 : f32
    %83 = vector.broadcast %cst_20 : f32 to vector<4x256xf32>
    %84 = arith.maximumf %82, %83 : vector<4x256xf32>
    %85 = vector.extract_strided_slice %84 {offsets = [0, 1], sizes = [4, 255], strides = [1, 1]} : vector<4x256xf32> to vector<4x255xf32>
    %86 = vector.extract_strided_slice %84 {offsets = [0, 255], sizes = [4, 1], strides = [1, 1]} : vector<4x256xf32> to vector<4x1xf32>
    %87 = tpu.concatenate %85, %86 in 1 : vector<4x255xf32>, vector<4x1xf32> -> vector<4x256xf32>
    %88 = vector.extract_strided_slice %84 {offsets = [0, 0], sizes = [4, 1], strides = [1, 1]} : vector<4x256xf32> to vector<4x1xf32>
    %89 = vector.extract_strided_slice %84 {offsets = [0, 0], sizes = [4, 255], strides = [1, 1]} : vector<4x256xf32> to vector<4x255xf32>
    %90 = tpu.concatenate %88, %89 in 1 : vector<4x1xf32>, vector<4x255xf32> -> vector<4x256xf32>
    %91 = vector.shape_cast %20 : vector<1x256xi1> to vector<1x256xi1>
    %92 = vector.broadcast %91 : vector<1x256xi1> to vector<4x256xi1>
    %93 = arith.select %92, %87, %90 : vector<4x256xi1>, vector<4x256xf32>
    %94 = vector.shape_cast %22 : vector<1x256xi1> to vector<1x256xi1>
    %95 = vector.broadcast %94 : vector<1x256xi1> to vector<4x256xi1>
    %96 = arith.select %95, %90, %87 : vector<4x256xi1>, vector<4x256xf32>
    %97 = vector.extract_strided_slice %93 {offsets = [0, 16], sizes = [4, 16], strides = [1, 1]} : vector<4x256xf32> to vector<4x16xf32>
    %98 = vector.extract_strided_slice %93 {offsets = [0, 0], sizes = [4, 240], strides = [1, 1]} : vector<4x256xf32> to vector<4x240xf32>
    %99 = tpu.concatenate %97, %98 in 1 : vector<4x16xf32>, vector<4x240xf32> -> vector<4x256xf32>
    %100 = vector.extract_strided_slice %84 {offsets = [0, 16], sizes = [4, 16], strides = [1, 1]} : vector<4x256xf32> to vector<4x16xf32>
    %101 = vector.extract_strided_slice %84 {offsets = [0, 0], sizes = [4, 240], strides = [1, 1]} : vector<4x256xf32> to vector<4x240xf32>
    %102 = tpu.concatenate %100, %101 in 1 : vector<4x16xf32>, vector<4x240xf32> -> vector<4x256xf32>
    %103 = vector.extract_strided_slice %96 {offsets = [0, 16], sizes = [4, 16], strides = [1, 1]} : vector<4x256xf32> to vector<4x16xf32>
    %104 = vector.extract_strided_slice %96 {offsets = [0, 0], sizes = [4, 240], strides = [1, 1]} : vector<4x256xf32> to vector<4x240xf32>
    %105 = tpu.concatenate %103, %104 in 1 : vector<4x16xf32>, vector<4x240xf32> -> vector<4x256xf32>
    %106 = tpu.concatenate %99, %102, %105 in 0 : vector<4x256xf32>, vector<4x256xf32>, vector<4x256xf32> -> vector<12x256xf32>
    %107 = tpu.concatenate %93, %84, %96 in 0 : vector<4x256xf32>, vector<4x256xf32>, vector<4x256xf32> -> vector<12x256xf32>
    %108 = vector.extract_strided_slice %93 {offsets = [0, 16], sizes = [4, 240], strides = [1, 1]} : vector<4x256xf32> to vector<4x240xf32>
    %109 = vector.extract_strided_slice %93 {offsets = [0, 224], sizes = [4, 16], strides = [1, 1]} : vector<4x256xf32> to vector<4x16xf32>
    %110 = tpu.concatenate %108, %109 in 1 : vector<4x240xf32>, vector<4x16xf32> -> vector<4x256xf32>
    %111 = vector.extract_strided_slice %84 {offsets = [0, 16], sizes = [4, 240], strides = [1, 1]} : vector<4x256xf32> to vector<4x240xf32>
    %112 = vector.extract_strided_slice %84 {offsets = [0, 224], sizes = [4, 16], strides = [1, 1]} : vector<4x256xf32> to vector<4x16xf32>
    %113 = tpu.concatenate %111, %112 in 1 : vector<4x240xf32>, vector<4x16xf32> -> vector<4x256xf32>
    %114 = vector.extract_strided_slice %96 {offsets = [0, 16], sizes = [4, 240], strides = [1, 1]} : vector<4x256xf32> to vector<4x240xf32>
    %115 = vector.extract_strided_slice %96 {offsets = [0, 224], sizes = [4, 16], strides = [1, 1]} : vector<4x256xf32> to vector<4x16xf32>
    %116 = tpu.concatenate %114, %115 in 1 : vector<4x240xf32>, vector<4x16xf32> -> vector<4x256xf32>
    %117 = tpu.concatenate %110, %113, %116 in 0 : vector<4x256xf32>, vector<4x256xf32>, vector<4x256xf32> -> vector<12x256xf32>
    %c0_21 = arith.constant 0 : index
    %c0_22 = arith.constant 0 : index
    %c0_23 = arith.constant 0 : index
    %118 = vector.load %arg3[%c0_21, %c0_22, %c0_23] : memref<3x4x12xf32, #tpu.memory_space<vmem>>, vector<1x4x12xf32>
    %119 = vector.shape_cast %118 : vector<1x4x12xf32> to vector<4x12xf32>
    %cst_24 = arith.constant dense<0.000000e+00> : vector<4x256xf32>
    %120 = tpu.matmul %119, %106, %cst_24 {dimension_numbers = #tpu.dot_dimension_numbers<[1], [0], [0], [1], [0, 0, 1, 1], [], []>} : vector<4x12xf32>, vector<12x256xf32>, vector<4x256xf32> -> vector<4x256xf32>
    %c1_25 = arith.constant 1 : index
    %c0_26 = arith.constant 0 : index
    %c0_27 = arith.constant 0 : index
    %121 = vector.load %arg3[%c1_25, %c0_26, %c0_27] : memref<3x4x12xf32, #tpu.memory_space<vmem>>, vector<1x4x12xf32>
    %122 = vector.shape_cast %121 : vector<1x4x12xf32> to vector<4x12xf32>
    %cst_28 = arith.constant dense<0.000000e+00> : vector<4x256xf32>
    %123 = tpu.matmul %122, %107, %cst_28 {dimension_numbers = #tpu.dot_dimension_numbers<[1], [0], [0], [1], [0, 0, 1, 1], [], []>} : vector<4x12xf32>, vector<12x256xf32>, vector<4x256xf32> -> vector<4x256xf32>
    %124 = arith.addf %120, %123 : vector<4x256xf32>
    %c2_29 = arith.constant 2 : index
    %c0_30 = arith.constant 0 : index
    %c0_31 = arith.constant 0 : index
    %125 = vector.load %arg3[%c2_29, %c0_30, %c0_31] : memref<3x4x12xf32, #tpu.memory_space<vmem>>, vector<1x4x12xf32>
    %126 = vector.shape_cast %125 : vector<1x4x12xf32> to vector<4x12xf32>
    %cst_32 = arith.constant dense<0.000000e+00> : vector<4x256xf32>
    %127 = tpu.matmul %126, %117, %cst_32 {dimension_numbers = #tpu.dot_dimension_numbers<[1], [0], [0], [1], [0, 0, 1, 1], [], []>} : vector<4x12xf32>, vector<12x256xf32>, vector<4x256xf32> -> vector<4x256xf32>
    %128 = arith.addf %124, %127 : vector<4x256xf32>
    %cst_33 = arith.constant dense<0.000000e+00> : vector<4xf32>
    %129 = vector.multi_reduction <add>, %128, %cst_33 [1] : vector<4x256xf32> to vector<4xf32>
    %130 = vector.shape_cast %129 : vector<4xf32> to vector<4x1xf32>
    %cst_34 = arith.constant 3.906250e-03 : f32
    %131 = vector.broadcast %cst_34 : f32 to vector<4x1xf32>
    %132 = arith.mulf %130, %131 : vector<4x1xf32>
    %133 = vector.broadcast %132 : vector<4x1xf32> to vector<4x256xf32>
    %134 = arith.subf %128, %133 : vector<4x256xf32>
    %135 = arith.mulf %134, %134 : vector<4x256xf32>
    %cst_35 = arith.constant dense<0.000000e+00> : vector<4xf32>
    %136 = vector.multi_reduction <add>, %135, %cst_35 [1] : vector<4x256xf32> to vector<4xf32>
    %137 = vector.shape_cast %136 : vector<4xf32> to vector<4x1xf32>
    %cst_36 = arith.constant 3.906250e-03 : f32
    %138 = vector.broadcast %cst_36 : f32 to vector<4x1xf32>
    %139 = arith.mulf %137, %138 : vector<4x1xf32>
    %cst_37 = arith.constant 9.99999974E-6 : f32
    %140 = vector.broadcast %cst_37 : f32 to vector<4x1xf32>
    %141 = arith.addf %139, %140 : vector<4x1xf32>
    %142 = math.rsqrt %141 : vector<4x1xf32>
    %143 = vector.broadcast %142 : vector<4x1xf32> to vector<4x256xf32>
    %144 = arith.mulf %134, %143 : vector<4x256xf32>
    %145 = arith.addf %1, %144 : vector<4x256xf32>
    %c0_38 = arith.constant 0 : index
    %c0_39 = arith.constant 0 : index
    %c0_40 = arith.constant 0 : index
    %146 = vector.load %arg4[%c0_38, %c0_39, %c0_40] : memref<1x4x256xf32, #tpu.memory_space<vmem>>, vector<1x4x256xf32>
    %147 = vector.shape_cast %146 : vector<1x4x256xf32> to vector<4x256xf32>
    %148 = vector.shape_cast %145 : vector<4x256xf32> to vector<1x4x256xf32>
    tpu.vector_store %arg4[%c0_38, %c0_39, %c0_40], %148 {strides = array<i32>} : memref<1x4x256xf32, #tpu.memory_space<vmem>>, vector<1x4x256xf32>,
    return
  }
  func.func @transform_0(%arg0: i32) -> (i32, i32, i32) {
    %c0_i32 = arith.constant 0 : i32
    %c0_i32_0 = arith.constant 0 : i32
    %c0_i32_1 = arith.constant 0 : i32
    return %arg0, %c0_i32, %c0_i32_0 : i32, i32, i32
  }
  func.func @transform_1(%arg0: i32) -> (i32, i32, i32) {
    %c0_i32 = arith.constant 0 : i32
    %c0_i32_0 = arith.constant 0 : i32
    %c0_i32_1 = arith.constant 0 : i32
    %c0_i32_2 = arith.constant 0 : i32
    return %c0_i32, %c0_i32_0, %c0_i32_1 : i32, i32, i32
  }
  func.func @transform_2(%arg0: i32) -> (i32, i32, i32) {
    %c0_i32 = arith.constant 0 : i32
    %c0_i32_0 = arith.constant 0 : i32
    %c0_i32_1 = arith.constant 0 : i32
    %c0_i32_2 = arith.constant 0 : i32
    return %c0_i32, %c0_i32_0, %c0_i32_1 : i32, i32, i32
  }
  func.func @transform_3(%arg0: i32) -> (i32, i32, i32) {
    %c0_i32 = arith.constant 0 : i32
    %c0_i32_0 = arith.constant 0 : i32
    %c0_i32_1 = arith.constant 0 : i32
    return %arg0, %c0_i32, %c0_i32_0 : i32, i32, i32
  }
}

</mosaic_0001>

<llo_original>
// kernel: tpu_custom_call.1
$region0: #{tpu_custom_call.1}
  #allocation0 [shape = 'u32[]', space=smem, size = 0x4, offset = 0x4, fixed_abs, tag = 'smem constant byte address 0x4 - core index']
  #allocation1 [shape = 'u32[144,128]{1,0:T(1,128)}', space=vmem, size = 0x12000, scoped, tag = 'internal scratch']
  %s0 = inlined_call_operand.hbm [shape: f32[2,4,256], index: 0, kind: input, shape index: {}]
  %s1 = inlined_call_operand.hbm [shape: f32[3,4,12], index: 1, kind: input, shape index: {}]
  %s2 = inlined_call_operand.hbm [shape: f32[3,4,12], index: 2, kind: input, shape index: {}]
  %s3 = inlined_call_operand.hbm [shape: f32[2,4,256], index: 3, kind: output, shape index: {}]
  %s4 = sld [smem:[#allocation0]]
  $region57: #{tpu_custom_call.1} parent=0
    _
  %s6 = ssub.s32 1, %s4
  %s7 = scalar_select 0, %s6, %s4
  $region1: #{tpu_custom_call.1} parent=0
    #allocation2 [shape = 'u8[8192]{0}', space=vmem, size = 0x2000, scoped, tag = 'input window, operand 0']
    #allocation3 [shape = 's32[2]{0}', space=sflag, size = 0x8, scoped, tag = 'scoped memory for tpu_custom_call.1']
    #allocation4 [shape = 's32[2]{0}', space=sflag, size = 0x8, scoped, tag = 'scoped memory for tpu_custom_call.1']
    #allocation5 [shape = 'u8[6144]{0}', space=vmem, size = 0x1800, scoped, tag = 'input window, operand 1, single buffered']
    #allocation6 [shape = 's32[1]{0}', space=sflag, size = 0x4, scoped, tag = 'scoped memory for tpu_custom_call.1']
    #allocation7 [shape = 'u8[6144]{0}', space=vmem, size = 0x1800, scoped, tag = 'input window, operand 2, single buffered']
    #allocation8 [shape = 'u8[8192]{0}', space=vmem, size = 0x2000, scoped, tag = 'output window, operand 0']
    %8 = vsyncpa [#allocation3], 0
    %s9 = scalar_lea.sflag [#allocation3], 1
    %10 = vsyncpa %s9, 0
    %11 = vsyncpa [#allocation6], 0
    %12 = vsyncpa [#allocation4], 0
    %s13 = scalar_lea.sflag [#allocation4], 1
    %14 = vsyncpa %s13, 0
    loop: start=0, step=1, limit=4
    $region2: #{tpu_custom_call.1} parent=1 // loop_pre_header
      _
    $region3: #{tpu_custom_call.1} parent=1 // loop_header
      %s16 = sphi 0, %s20
      %p17 = scmp.ge.s32.totalorder %s16, 4
      %s26 = sphi 0, %s28
      %s29 = sphi 0, %s26
      %s30 = sphi 0, %s29
      %s46 = sphi 0, %s30
      %s50 = sphi 0, %s50
      %s52 = sphi 0, %s50
      %s53 = sphi 0, %s52
      %s67 = sphi 0, %s53
      %s71 = sphi 0, %s71
      %s73 = sphi 0, %s71
      %s74 = sphi 0, %s73
      %s88 = sphi 0, %s74
      %s94 = sphi 0, %s96
      %s97 = sphi 0, %s94
      %s98 = sphi 0, %s97
      %s114 = sphi 0, %s98
    $region4: #{tpu_custom_call.1} parent=1 // loop_header_branch
      %19 = sbr.rel (%p17) target = $region8
    $region5: #{tpu_custom_call.1} parent=1 // loop_body
      %s21 = ssub.s32 %s16, 1
      %s22 = ssub.s32 %s16, 2
      %s23 = sadd.s32 %s16, 1
      %s24 = ssub.s32 %s16, %s23
      %p25 = scmp.eq.s32.totalorder %s24, 0
      %s27 = sadd.s32 %s26, 1
      %s28 = scalar_select %p25, %s26, %s27
      %p31 = pneg %p25
      %p32 = scmp.eq.s32.totalorder %s16, 1
      %p33 = por %p31, %p32
      %p34 = scmp.ne.s32.totalorder %s26, %s29
      %p35 = scmp.eq.s32.totalorder %s16, 0
      %p36 = por %p34, %p35
      %p37 = scmp.ne.s32.totalorder %s26, %s29
      %p38 = scmp.eq.s32.totalorder %s21, 1
      %p39 = por %p37, %p38
      %p40 = scmp.ne.s32.totalorder %s29, %s30
      %p41 = scmp.eq.s32.totalorder %s21, 0
      %p42 = por %p40, %p41
      %p43 = scmp.ne.s32.totalorder %s29, %s30
      %p44 = scmp.eq.s32.totalorder %s22, 1
      %p45 = por %p43, %p44
      %p47 = scmp.ne.s32.totalorder %s30, %s46
      %p48 = scmp.eq.s32.totalorder %s22, 0
      %p49 = por %p47, %p48
      %s51 = sadd.s32 %s50, 1
      %p54 = scmp.eq.s32.totalorder %s16, 1
      %p55 = scmp.ne.s32.totalorder %s50, %s52
      %p56 = scmp.eq.s32.totalorder %s16, 0
      %p57 = por %p55, %p56
      %p58 = scmp.ne.s32.totalorder %s50, %s52
      %p59 = scmp.eq.s32.totalorder %s21, 1
      %p60 = por %p58, %p59
      %p61 = scmp.ne.s32.totalorder %s52, %s53
      %p62 = scmp.eq.s32.totalorder %s21, 0
      %p63 = por %p61, %p62
      %p64 = scmp.ne.s32.totalorder %s52, %s53
      %p65 = scmp.eq.s32.totalorder %s22, 1
      %p66 = por %p64, %p65
      %p68 = scmp.ne.s32.totalorder %s53, %s67
      %p69 = scmp.eq.s32.totalorder %s22, 0
      %p70 = por %p68, %p69
      %s72 = sadd.s32 %s71, 1
      %p75 = scmp.eq.s32.totalorder %s16, 1
      %p76 = scmp.ne.s32.totalorder %s71, %s73
      %p77 = scmp.eq.s32.totalorder %s16, 0
      %p78 = por %p76, %p77
      %p79 = scmp.ne.s32.totalorder %s71, %s73
      %p80 = scmp.eq.s32.totalorder %s21, 1
      %p81 = por %p79, %p80
      %p82 = scmp.ne.s32.totalorder %s73, %s74
      %p83 = scmp.eq.s32.totalorder %s21, 0
      %p84 = por %p82, %p83
      %p85 = scmp.ne.s32.totalorder %s73, %s74
      %p86 = scmp.eq.s32.totalorder %s22, 1
      %p87 = por %p85, %p86
      %p89 = scmp.ne.s32.totalorder %s74, %s88
      %p90 = scmp.eq.s32.totalorder %s22, 0
      %p91 = por %p89, %p90
      %s92 = ssub.s32 %s16, %s23
      %p93 = scmp.eq.s32.totalorder %s92, 0
      %s95 = sadd.s32 %s94, 1
      %s96 = scalar_select %p93, %s94, %s95
      %p99 = pneg %p93
      %p100 = scmp.eq.s32.totalorder %s16, 1
      %p101 = por %p99, %p100
      %p102 = scmp.ne.s32.totalorder %s94, %s97
      %p103 = scmp.eq.s32.totalorder %s16, 0
      %p104 = por %p102, %p103
      %p105 = scmp.ne.s32.totalorder %s94, %s97
      %p106 = scmp.eq.s32.totalorder %s21, 1
      %p107 = por %p105, %p106
      %p108 = scmp.ne.s32.totalorder %s97, %s98
      %p109 = scmp.eq.s32.totalorder %s21, 0
      %p110 = por %p108, %p109
      %p111 = scmp.ne.s32.totalorder %s97, %s98
      %p112 = scmp.eq.s32.totalorder %s22, 1
      %p113 = por %p111, %p112
      %p115 = scmp.ne.s32.totalorder %s98, %s114
      %p116 = scmp.eq.s32.totalorder %s22, 0
      %p117 = por %p115, %p116
      %p118 = scmp.le.s32.totalorder 1, %s16
      %p119 = scmp.lt.s32.totalorder %s16, 3
      %p120 = pnand %p118, %p119
      %p121 = pneg %p120
      // Predicated region
      $region9: #{tpu_custom_call.1} parent=5 // pred_check
        _
      $region10: #{tpu_custom_call.1} parent=5 // pred_check_branch
        %123 = sbr.rel (%p120) target = $region12
      $region11: #{tpu_custom_call.1} parent=5 // pred_region
        %s124 = ssub.s32 %s16, 1
        // Predicated region
        $region13: #{tpu_custom_call.1} parent=11 // pred_check
          %p125 = pneg %p63
        $region14: #{tpu_custom_call.1} parent=11 // pred_check_branch
          %127 = sbr.rel (%p125) target = $region16
        $region15: #{tpu_custom_call.1} parent=11 // pred_region
          %s129 = ssub.s32 192, 192
          %130 = vsyncadd [#allocation6], %s129
          %s131 = sshll.u32 [#allocation5], 4
          %s132 = int_to_ptr.vmem [resolvable:$true] %s131
          %137 = dma.hbm_to_vmem [thread:$0]  %s1, 192, %s132, [#allocation6], 64, 64, 4
        $region16: #{tpu_custom_call.1} parent=11 // pred_fallthru
          _
        // Predicated region
        $region17: #{tpu_custom_call.1} parent=11 // pred_check
          %p138 = pneg %p84
        $region18: #{tpu_custom_call.1} parent=11 // pred_check_branch
          %140 = sbr.rel (%p138) target = $region20
        $region19: #{tpu_custom_call.1} parent=11 // pred_region
          %s142 = ssub.s32 192, 192
          %143 = vsyncadd [#allocation6], %s142
          %s144 = sshll.u32 [#allocation7], 4
          %s145 = int_to_ptr.vmem [resolvable:$true] %s144
          %150 = dma.hbm_to_vmem [thread:$0]  %s2, 192, %s145, [#allocation6], 64, 64, 4
        $region20: #{tpu_custom_call.1} parent=11 // pred_fallthru
          _
      $region12: #{tpu_custom_call.1} parent=5 // pred_fallthru
        _
      %p151 = scmp.lt.s32.totalorder %s16, 2
      // Predicated region
      $region21: #{tpu_custom_call.1} parent=5 // pred_check
        %p152 = pneg %p151
      $region22: #{tpu_custom_call.1} parent=5 // pred_check_branch
        %154 = sbr.rel (%p152) target = $region24
      $region23: #{tpu_custom_call.1} parent=5 // pred_region
        // Predicated region
        $region25: #{tpu_custom_call.1} parent=23 // pred_check
          %p155 = pneg %p36
        $region26: #{tpu_custom_call.1} parent=23 // pred_check_branch
          %157 = sbr.rel (%p155) target = $region28
        $region27: #{tpu_custom_call.1} parent=23 // pred_region
          %s158 = sand.u32 %s26, 1
          %s159 = scalar_lea.sflag [#allocation3], %s158
          %s160 = sand.u32 %s26, 1
          %s161 = smul.addr %s160, 8
          %s162 = scalar_lea.vmem [#allocation2], %s161
          %s164 = ssub.s32 128, 128
          %165 = vsyncadd %s159, %s164
          %s166 = smul.addr %s16, 2
          %s167 = smul.addr %s166, 64
          %s168 = scalar_lea.hbm %s0, %s167
          %s170 = sshll.u32 %s162, 4
          %s171 = int_to_ptr.vmem [resolvable:$true] %s170
          %173 = dma.hbm_to_vmem [thread:$0]  %s168, 128, %s171, %s159
        $region28: #{tpu_custom_call.1} parent=23 // pred_fallthru
          _
      $region24: #{tpu_custom_call.1} parent=5 // pred_fallthru
        _
      %p174 = scmp.le.s32.totalorder 1, %s16
      %p175 = scmp.lt.s32.totalorder %s16, 3
      %p176 = pnand %p174, %p175
      %p177 = pneg %p176
      // Predicated region
      $region29: #{tpu_custom_call.1} parent=5 // pred_check
        _
      $region30: #{tpu_custom_call.1} parent=5 // pred_check_branch
        %179 = sbr.rel (%p176) target = $region32
      $region31: #{tpu_custom_call.1} parent=5 // pred_region
        %s180 = ssub.s32 %s16, 1
        %s181 = sand.u32 %s29, 1
        %s182 = scalar_lea.sflag [#allocation3], %s181
        %s183 = sand.u32 %s29, 1
        %s184 = smul.addr %s183, 8
        %s185 = scalar_lea.vmem [#allocation2], %s184
        // Predicated region
        $region33: #{tpu_custom_call.1} parent=31 // pred_check
          %p186 = pneg %p42
        $region34: #{tpu_custom_call.1} parent=31 // pred_check_branch
          %188 = sbr.rel (%p186) target = $region36
        $region35: #{tpu_custom_call.1} parent=31 // pred_region
          %189 = dma.done %s182, 128
        $region36: #{tpu_custom_call.1} parent=31 // pred_fallthru
          _
        // Predicated region
        $region37: #{tpu_custom_call.1} parent=31 // pred_check
          %p190 = pneg %p63
        $region38: #{tpu_custom_call.1} parent=31 // pred_check_branch
          %192 = sbr.rel (%p190) target = $region40
        $region39: #{tpu_custom_call.1} parent=31 // pred_region
          %193 = dma.done [#allocation6], 192
        $region40: #{tpu_custom_call.1} parent=31 // pred_fallthru
          _
        // Predicated region
        $region41: #{tpu_custom_call.1} parent=31 // pred_check
          %p194 = pneg %p84
        $region42: #{tpu_custom_call.1} parent=31 // pred_check_branch
          %196 = sbr.rel (%p194) target = $region44
        $region43: #{tpu_custom_call.1} parent=31 // pred_region
          %197 = dma.done [#allocation6], 192
        $region44: #{tpu_custom_call.1} parent=31 // pred_fallthru
          _
        %s198 = sand.u32 %s29, 1
        %s199 = scalar_lea.sflag [#allocation3], %s198
        %s200 = sand.u32 %s29, 1
        %s201 = smul.addr %s200, 8
        %s202 = scalar_lea.vmem [#allocation2], %s201
        %p203 = pneg %p42
        %p204 = pneg %p39
        %p205 = pneg %p63
        %p206 = pneg %p60
        %p207 = pneg %p84
        %p208 = pneg %p81
        %p209 = pneg %p110
        %p210 = pneg %p107
        %s211 = sand.u32 %s97, 1
        %s212 = scalar_lea.sflag [#allocation4], %s211
        %s213 = sand.u32 %s97, 1
        %s214 = smul.addr %s213, 8
        %s215 = scalar_lea.vmem [#allocation8], %s214
        %v216 = vld [vmem:[%s185] sm:$0xff]
        %v217 = vlaneseq
        %v218 = vand.u32 %v217, 127
        %v219 = vadd.s32 %v218, 128
        %vm220 = vcmp.lt.s32.totalorder %v218, 0
        %v221 = vsub.s32 0, %v218
        %v222 = vsel %vm220, %v221, %v218
        %v223 = vshrl.u32 %v222, 4
        %v224 = vand.u32 %v222, 15
        %v225 = vsub.s32 0, %v224
        %v226 = vsel %vm220, %v225, %v224
        %vm227 = vcmp.lt.s32.totalorder %v219, 0
        %v228 = vsub.s32 0, %v219
        %v229 = vsel %vm227, %v228, %v219
        %v230 = vshrl.u32 %v229, 4
        %v231 = vand.u32 %v229, 15
        %v232 = vsub.s32 0, %v231
        %v233 = vsel %vm227, %v232, %v231
        %vm234 = vcmp.ne.s32.totalorder %v226, 0
        %vm235 = vcmp.ne.s32.totalorder %v233, 0
        %vm236 = vcmp.lt.s32.totalorder %v226, 0
        %vm237 = vcmp.lt.s32.totalorder %v233, 0
        %vm238 = vmand %vm236, %vm234
        %vm239 = vmand %vm237, %vm235
        %v240 = vadd.s32 %v226, 16
        %v241 = vadd.s32 %v233, 16
        %v242 = vsel %vm238, %v240, %v226
        %v243 = vsel %vm239, %v241, %v233
        %vm244 = vcmp.eq.s32.totalorder %v242, 0
        %vm245 = vcmp.eq.s32.totalorder %v243, 0
        %vm246 = vcmp.eq.s32.totalorder %v242, 15
        %vm247 = vcmp.eq.s32.totalorder %v243, 15
        %v249 = vcombine.high %v216, %v216
        %250 = vrot.lane.b32.xlu0 %v216, 127
        %v251 = vpop.permute.xlu0 %250
        %252 = vrot.lane.b32.xlu0 %v249, 127
        %v253 = vpop.permute.xlu0 %252
        %vm254 = vcmask 1039360
        %v255 = vsel %vm254, %v251, %v253
        %v259 = vsel %vm254, %v253, %v249
        %260 = vrot.lane.b32.xlu0 %v216, 1
        %v261 = vpop.permute.xlu0 %260
        %262 = vrot.lane.b32.xlu0 %v249, 1
        %v263 = vpop.permute.xlu0 %262
        %vm264 = vcmask 7168
        %v265 = vsel %vm264, %v261, %v263
        %v268 = vsel %vm264, %v216, %v261
        %v269 = vsel %vm244, 1, 0
        %v270 = vsel %vm245, 1, 0
        %vm271 = vcmp.eq.s32.totalorder %v269, 1
        %vm272 = vcmp.eq.s32.totalorder %v270, 1
        %v273 = vsel %vm271, %v255, %v268
        %v274 = vsel %vm272, %v259, %v265
        %v275 = vsel %vm246, 1, 0
        %v276 = vsel %vm247, 1, 0
        %vm277 = vcmp.eq.s32.totalorder %v275, 1
        %vm278 = vcmp.eq.s32.totalorder %v276, 1
        %v279 = vsel %vm277, %v268, %v255
        %v280 = vsel %vm278, %v265, %v259
        %282 = vrot.lane.b32.xlu0 %v273, 112
        %v283 = vpop.permute.xlu0 %282
        %286 = vrot.lane.b32.xlu0 %v273, 16
        %v287 = vpop.permute.xlu0 %286
        %288 = vrot.lane.b32.xlu0 %v274, 16
        %v289 = vpop.permute.xlu0 %288
        %vm290 = vcmask 130048
        %v291 = vsel %vm290, %v287, %v289
        %v294 = vsel %vm290, %v283, %v287
        %295 = vrot.lane.b32.xlu0 %v216, 112
        %v296 = vpop.permute.xlu0 %295
        %298 = vrot.lane.b32.xlu0 %v216, 16
        %v299 = vpop.permute.xlu0 %298
        %300 = vrot.lane.b32.xlu0 %v249, 16
        %v301 = vpop.permute.xlu0 %300
        %v302 = vsel %vm290, %v299, %v301
        %v304 = vsel %vm290, %v296, %v299
        %306 = vrot.lane.b32.xlu0 %v279, 112
        %v307 = vpop.permute.xlu0 %306
        %310 = vrot.lane.b32.xlu0 %v279, 16
        %v311 = vpop.permute.xlu0 %310
        %312 = vrot.lane.b32.xlu0 %v280, 16
        %v313 = vpop.permute.xlu0 %312
        %v314 = vsel %vm290, %v311, %v313
        %v316 = vsel %vm290, %v307, %v311
        %v318 = vrot.slane %v304, 4
        %v319 = vrot.slane %v302, 4
        %vm322 = vcmask 1043456
        %v323 = vsel %vm322, %v294, %v318
        %v324 = vsel %vm322, %v291, %v319
        %v325 = vcombine.low %v216, %v216
        %v327 = vsel %vm322, %v273, %v325
        %v328 = vsel %vm322, %v274, %v216
        %329 = vrot.lane.b32.xlu0 %v274, 112
        %v330 = vpop.permute.xlu0 %329
        %vm331 = vcmask 916480
        %v332 = vsel %vm331, %v283, %v330
        %v336 = vsel %vm331, %v330, %v289
        %337 = vrot.lane.b32.xlu0 %v249, 112
        %v338 = vpop.permute.xlu0 %337
        %v339 = vsel %vm331, %v296, %v338
        %v342 = vsel %vm331, %v338, %v301
        %343 = vrot.lane.b32.xlu0 %v280, 112
        %v344 = vpop.permute.xlu0 %343
        %v345 = vsel %vm331, %v307, %v344
        %v348 = vsel %vm331, %v344, %v313
        %v350 = vrot.slane %v339, 4
        %v351 = vrot.slane %v342, 4
        %v354 = vsel %vm322, %v332, %v350
        %v355 = vsel %vm322, %v336, %v351
        %v356 = vld [vmem:[#allocation5] sm:$0xf]
        %s357 = scalar_lea.vmem [#allocation5], 4
        %v358 = vld [vmem:[%s357] sm:$0xf]
        %vm359 = vcmask 97280
        %v361 = vsel %vm359, %v358, 0
        %v363 = vsel %vm322, %v279, 0
        %v365 = vsel %vm322, %v280, 0
        %367 = vmatprep.subr.mxu0 %v328
        %368 = vmatpush1.msra.mxu0 %v327
        %369 = vmatprep.subr.mxu0 %v365
        %370 = vmatpush1.msra.mxu0 %v363
        %371 = vmatprep.subr.mxu0 0.0
        %372 = vmatpush1.msra.mxu0 0.0
        %373 = vmatprep.subr.mxu0 0.0
        %374 = vmatpush1.msra.mxu0 0.0
        %375 = vmatprep.subr.mxu0 0.0
        %376 = vmatpush1.msra.mxu0 0.0
        %377 = vmatprep.subr.mxu0 0.0
        %378 = vmatpush1.msra.mxu0 0.0
        %379 = vmatprep.subr.mxu0 0.0
        %380 = vmatpush1.msra.mxu0 0.0
        %381 = vmatprep.subr.mxu0 0.0
        %382 = vmatpush1.msra.mxu0 0.0
        %383 = vmatprep.subr.mxu0 0.0
        %384 = vmatpush1.msra.mxu0 0.0
        %385 = vmatprep.subr.mxu0 0.0
        %386 = vmatpush1.msra.mxu0 0.0
        %387 = vmatprep.subr.mxu0 0.0
        %388 = vmatpush1.msra.mxu0 0.0
        %389 = vmatprep.subr.mxu0 0.0
        %390 = vmatpush1.msra.mxu0 0.0
        %391 = vmatprep.subr.mxu0 0.0
        %392 = vmatpush1.msra.mxu0 0.0
        %393 = vmatprep.subr.mxu0 0.0
        %394 = vmatpush1.msra.mxu0 0.0
        %395 = vmatprep.subr.mxu0 0.0
        %396 = vmatpush1.msra.mxu0 0.0
        %397 = vmatprep.subr.mxu0 0.0
        %398 = vmatpush1.msra.mxu0 0.0
        %399 = vmatprep.subr.mxu0 0.0
        %400 = vmatpush1.msra.mxu0 0.0
        %401 = vmatprep.subr.mxu0 0.0
        %402 = vmatpush1.msra.mxu0 0.0
        %403 = vmatprep.subr.mxu0 0.0
        %404 = vmatpush1.msra.mxu0 0.0
        %405 = vmatprep.subr.mxu0 0.0
        %406 = vmatpush1.msra.mxu0 0.0
        %407 = vmatprep.subr.mxu0 0.0
        %408 = vmatpush1.msra.mxu0 0.0
        %409 = vmatprep.subr.mxu0 0.0
        %410 = vmatpush1.msra.mxu0 0.0
        %411 = vmatprep.subr.mxu0 0.0
        %412 = vmatpush1.msra.mxu0 0.0
        %413 = vmatprep.subr.mxu0 0.0
        %414 = vmatpush1.msra.mxu0 0.0
        %415 = vmatprep.subr.mxu0 0.0
        %416 = vmatpush1.msra.mxu0 0.0
        %417 = vmatprep.subr.mxu0 0.0
        %418 = vmatpush1.msra.mxu0 0.0
        %419 = vmatprep.subr.mxu0 0.0
        %420 = vmatpush1.msra.mxu0 0.0
        %421 = vmatprep.subr.mxu0 0.0
        %422 = vmatpush1.msra.mxu0 0.0
        %423 = vmatprep.subr.mxu0 0.0
        %424 = vmatpush1.msra.mxu0 0.0
        %425 = vmatprep.subr.mxu0 0.0
        %426 = vmatpush1.msra.mxu0 0.0
        %427 = vmatprep.subr.mxu0 0.0
        %428 = vmatpush1.msra.mxu0 0.0
        %429 = vmatprep.subr.mxu0 0.0
        %430 = vmatpush1.msra.mxu0 0.0
        %431 = vmatprep.mubr.f32.mxu0 0.0
        %432 = vmatmul.mubr.f32.gmra.mrb[0].mxu0 %v361
        %v433 = vpop.f32.mrb[0].mxu0
        %v434 = vadd.f32 0.0, %v433
        %v435 = vpop.f32.mrb[0].mxu0
        %v436 = vadd.f32 0.0, %v435
        %437 = vdwg.mxu0
        %v439 = vsel %vm359, %v356, 0
        %v442 = vsel %vm322, %v316, 0
        %v444 = vsel %vm322, %v314, 0
        %446 = vmatprep.subr.mxu0 %v324
        %447 = vmatpush1.msra.mxu0 %v323
        %448 = vmatprep.subr.mxu0 %v444
        %449 = vmatpush1.msra.mxu0 %v442
        %450 = vmatprep.subr.mxu0 0.0
        %451 = vmatpush1.msra.mxu0 0.0
        %452 = vmatprep.subr.mxu0 0.0
        %453 = vmatpush1.msra.mxu0 0.0
        %454 = vmatprep.subr.mxu0 0.0
        %455 = vmatpush1.msra.mxu0 0.0
        %456 = vmatprep.subr.mxu0 0.0
        %457 = vmatpush1.msra.mxu0 0.0
        %458 = vmatprep.subr.mxu0 0.0
        %459 = vmatpush1.msra.mxu0 0.0
        %460 = vmatprep.subr.mxu0 0.0
        %461 = vmatpush1.msra.mxu0 0.0
        %462 = vmatprep.subr.mxu0 0.0
        %463 = vmatpush1.msra.mxu0 0.0
        %464 = vmatprep.subr.mxu0 0.0
        %465 = vmatpush1.msra.mxu0 0.0
        %466 = vmatprep.subr.mxu0 0.0
        %467 = vmatpush1.msra.mxu0 0.0
        %468 = vmatprep.subr.mxu0 0.0
        %469 = vmatpush1.msra.mxu0 0.0
        %470 = vmatprep.subr.mxu0 0.0
        %471 = vmatpush1.msra.mxu0 0.0
        %472 = vmatprep.subr.mxu0 0.0
        %473 = vmatpush1.msra.mxu0 0.0
        %474 = vmatprep.subr.mxu0 0.0
        %475 = vmatpush1.msra.mxu0 0.0
        %476 = vmatprep.subr.mxu0 0.0
        %477 = vmatpush1.msra.mxu0 0.0
        %478 = vmatprep.subr.mxu0 0.0
        %479 = vmatpush1.msra.mxu0 0.0
        %480 = vmatprep.subr.mxu0 0.0
        %481 = vmatpush1.msra.mxu0 0.0
        %482 = vmatprep.subr.mxu0 0.0
        %483 = vmatpush1.msra.mxu0 0.0
        %484 = vmatprep.subr.mxu0 0.0
        %485 = vmatpush1.msra.mxu0 0.0
        %486 = vmatprep.subr.mxu0 0.0
        %487 = vmatpush1.msra.mxu0 0.0
        %488 = vmatprep.subr.mxu0 0.0
        %489 = vmatpush1.msra.mxu0 0.0
        %490 = vmatprep.subr.mxu0 0.0
        %491 = vmatpush1.msra.mxu0 0.0
        %492 = vmatprep.subr.mxu0 0.0
        %493 = vmatpush1.msra.mxu0 0.0
        %494 = vmatprep.subr.mxu0 0.0
        %495 = vmatpush1.msra.mxu0 0.0
        %496 = vmatprep.subr.mxu0 0.0
        %497 = vmatpush1.msra.mxu0 0.0
        %498 = vmatprep.subr.mxu0 0.0
        %499 = vmatpush1.msra.mxu0 0.0
        %500 = vmatprep.subr.mxu0 0.0
        %501 = vmatpush1.msra.mxu0 0.0
        %502 = vmatprep.subr.mxu0 0.0
        %503 = vmatpush1.msra.mxu0 0.0
        %504 = vmatprep.subr.mxu0 0.0
        %505 = vmatpush1.msra.mxu0 0.0
        %506 = vmatprep.subr.mxu0 0.0
        %507 = vmatpush1.msra.mxu0 0.0
        %508 = vmatprep.subr.mxu0 0.0
        %509 = vmatpush1.msra.mxu0 0.0
        %510 = vmatprep.mubr.f32.mxu0 0.0
        %511 = vmatmul.mubr.f32.gmra.mrb[0].mxu0 %v439
        %v512 = vpop.f32.mrb[0].mxu0
        %v513 = vadd.f32 %v434, %v512
        %v514 = vpop.f32.mrb[0].mxu0
        %v515 = vadd.f32 %v436, %v514
        %516 = vdwg.mxu0
        %s517 = scalar_lea.vmem [#allocation5], 8
        %v518 = vld [vmem:[%s517] sm:$0xf]
        %v520 = vsel %vm359, %v518, 0
        %v522 = vsel %vm322, %v345, 0
        %v525 = vsel %vm322, %v348, 0
        %527 = vmatprep.subr.mxu0 %v355
        %528 = vmatpush1.msra.mxu0 %v354
        %529 = vmatprep.subr.mxu0 %v525
        %530 = vmatpush1.msra.mxu0 %v522
        %531 = vmatprep.subr.mxu0 0.0
        %532 = vmatpush1.msra.mxu0 0.0
        %533 = vmatprep.subr.mxu0 0.0
        %534 = vmatpush1.msra.mxu0 0.0
        %535 = vmatprep.subr.mxu0 0.0
        %536 = vmatpush1.msra.mxu0 0.0
        %537 = vmatprep.subr.mxu0 0.0
        %538 = vmatpush1.msra.mxu0 0.0
        %539 = vmatprep.subr.mxu0 0.0
        %540 = vmatpush1.msra.mxu0 0.0
        %541 = vmatprep.subr.mxu0 0.0
        %542 = vmatpush1.msra.mxu0 0.0
        %543 = vmatprep.subr.mxu0 0.0
        %544 = vmatpush1.msra.mxu0 0.0
        %545 = vmatprep.subr.mxu0 0.0
        %546 = vmatpush1.msra.mxu0 0.0
        %547 = vmatprep.subr.mxu0 0.0
        %548 = vmatpush1.msra.mxu0 0.0
        %549 = vmatprep.subr.mxu0 0.0
        %550 = vmatpush1.msra.mxu0 0.0
        %551 = vmatprep.subr.mxu0 0.0
        %552 = vmatpush1.msra.mxu0 0.0
        %553 = vmatprep.subr.mxu0 0.0
        %554 = vmatpush1.msra.mxu0 0.0
        %555 = vmatprep.subr.mxu0 0.0
        %556 = vmatpush1.msra.mxu0 0.0
        %557 = vmatprep.subr.mxu0 0.0
        %558 = vmatpush1.msra.mxu0 0.0
        %559 = vmatprep.subr.mxu0 0.0
        %560 = vmatpush1.msra.mxu0 0.0
        %561 = vmatprep.subr.mxu0 0.0
        %562 = vmatpush1.msra.mxu0 0.0
        %563 = vmatprep.subr.mxu0 0.0
        %564 = vmatpush1.msra.mxu0 0.0
        %565 = vmatprep.subr.mxu0 0.0
        %566 = vmatpush1.msra.mxu0 0.0
        %567 = vmatprep.subr.mxu0 0.0
        %568 = vmatpush1.msra.mxu0 0.0
        %569 = vmatprep.subr.mxu0 0.0
        %570 = vmatpush1.msra.mxu0 0.0
        %571 = vmatprep.subr.mxu0 0.0
        %572 = vmatpush1.msra.mxu0 0.0
        %573 = vmatprep.subr.mxu0 0.0
        %574 = vmatpush1.msra.mxu0 0.0
        %575 = vmatprep.subr.mxu0 0.0
        %576 = vmatpush1.msra.mxu0 0.0
        %577 = vmatprep.subr.mxu0 0.0
        %578 = vmatpush1.msra.mxu0 0.0
        %579 = vmatprep.subr.mxu0 0.0
        %580 = vmatpush1.msra.mxu0 0.0
        %581 = vmatprep.subr.mxu0 0.0
        %582 = vmatpush1.msra.mxu0 0.0
        %583 = vmatprep.subr.mxu0 0.0
        %584 = vmatpush1.msra.mxu0 0.0
        %585 = vmatprep.subr.mxu0 0.0
        %586 = vmatpush1.msra.mxu0 0.0
        %587 = vmatprep.subr.mxu0 0.0
        %588 = vmatpush1.msra.mxu0 0.0
        %589 = vmatprep.subr.mxu0 0.0
        %590 = vmatpush1.msra.mxu0 0.0
        %591 = vmatprep.mubr.f32.mxu0 0.0
        %592 = vmatmul.mubr.f32.gmra.mrb[0].mxu0 %v520
        %v593 = vpop.f32.mrb[0].mxu0
        %v594 = vadd.f32 0.0, %v593
        %v595 = vpop.f32.mrb[0].mxu0
        %v596 = vadd.f32 0.0, %v595
        %597 = vdwg.mxu0
        %v598 = vadd.f32 %v513, %v594
        %v599 = vadd.f32 %v515, %v596
        %v600 = vsel %vm322, %v598, 0.0
        %v601 = vsel %vm322, %v599, 0.0
        %v602 = vadd.f32 %v600, %v601
        %603 = vadd.xlane.f32.xlu0 %v602
        %v604 = vpop.xlane.xlu0 %603
        %v605 = vmul.f32 %v604, 0.00390625
        %v606 = vsub.f32 %v598, %v605
        %v607 = vsub.f32 %v599, %v605
        %v608 = vmul.f32 %v606, %v606
        %v609 = vmul.f32 %v607, %v607
        %v610 = vsel %vm322, %v608, 0.0
        %v611 = vsel %vm322, %v609, 0.0
        %v612 = vadd.f32 %v610, %v611
        %613 = vadd.xlane.f32.xlu0 %v612
        %v614 = vpop.xlane.xlu0 %613
        %v615 = vmul.f32 %v614, 0.00390625
        %v616 = vadd.f32 %v615, 1e-05
        %v617 = vrsqrt.pop %v616
        %v618 = vmul.f32 %v606, %v617
        %v619 = vmul.f32 %v607, %v617
        %v620 = vmax.f32 %v618, 0.0
        %v621 = vmax.f32 %v619, 0.0
        %624 = vrot.lane.b32.xlu0 %v620, 127
        %v625 = vpop.permute.xlu0 %624
        %626 = vrot.lane.b32.xlu0 %v621, 127
        %v627 = vpop.permute.xlu0 %626
        %v628 = vsel %vm254, %v625, %v627
        %v631 = vsel %vm254, %v627, %v621
        %632 = vrot.lane.b32.xlu0 %v620, 1
        %v633 = vpop.permute.xlu0 %632
        %634 = vrot.lane.b32.xlu0 %v621, 1
        %v635 = vpop.permute.xlu0 %634
        %v636 = vsel %vm264, %v633, %v635
        %v639 = vsel %vm264, %v620, %v633
        %v640 = vsel %vm271, %v628, %v639
        %v641 = vsel %vm272, %v631, %v636
        %v642 = vsel %vm277, %v639, %v628
        %v643 = vsel %vm278, %v636, %v631
        %645 = vrot.lane.b32.xlu0 %v640, 112
        %v646 = vpop.permute.xlu0 %645
        %649 = vrot.lane.b32.xlu0 %v640, 16
        %v650 = vpop.permute.xlu0 %649
        %651 = vrot.lane.b32.xlu0 %v641, 16
        %v652 = vpop.permute.xlu0 %651
        %v653 = vsel %vm290, %v650, %v652
        %v656 = vsel %vm290, %v646, %v650
        %657 = vrot.lane.b32.xlu0 %v620, 112
        %v658 = vpop.permute.xlu0 %657
        %660 = vrot.lane.b32.xlu0 %v620, 16
        %v661 = vpop.permute.xlu0 %660
        %662 = vrot.lane.b32.xlu0 %v621, 16
        %v663 = vpop.permute.xlu0 %662
        %v664 = vsel %vm290, %v661, %v663
        %v666 = vsel %vm290, %v658, %v661
        %668 = vrot.lane.b32.xlu0 %v642, 112
        %v669 = vpop.permute.xlu0 %668
        %672 = vrot.lane.b32.xlu0 %v642, 16
        %v673 = vpop.permute.xlu0 %672
        %674 = vrot.lane.b32.xlu0 %v643, 16
        %v675 = vpop.permute.xlu0 %674
        %v676 = vsel %vm290, %v673, %v675
        %v678 = vsel %vm290, %v669, %v673
        %v680 = vrot.slane %v666, 4
        %v681 = vrot.slane %v664, 4
        %v684 = vsel %vm322, %v656, %v680
        %v685 = vsel %vm322, %v653, %v681
        %v686 = vrot.slane %v620, 4
        %v687 = vrot.slane %v621, 4
        %v690 = vsel %vm322, %v640, %v686
        %v691 = vsel %vm322, %v641, %v687
        %692 = vrot.lane.b32.xlu0 %v641, 112
        %v693 = vpop.permute.xlu0 %692
        %v694 = vsel %vm331, %v646, %v693
        %v698 = vsel %vm331, %v693, %v652
        %699 = vrot.lane.b32.xlu0 %v621, 112
        %v700 = vpop.permute.xlu0 %699
        %v701 = vsel %vm331, %v658, %v700
        %v704 = vsel %vm331, %v700, %v663
        %705 = vrot.lane.b32.xlu0 %v643, 112
        %v706 = vpop.permute.xlu0 %705
        %v707 = vsel %vm331, %v669, %v706
        %v710 = vsel %vm331, %v706, %v675
        %v712 = vrot.slane %v701, 4
        %v713 = vrot.slane %v704, 4
        %v716 = vsel %vm322, %v694, %v712
        %v717 = vsel %vm322, %v698, %v713
        %v718 = vld [vmem:[#allocation7] sm:$0xf]
        %s719 = scalar_lea.vmem [#allocation7], 4
        %v720 = vld [vmem:[%s719] sm:$0xf]
        %v722 = vsel %vm359, %v720, 0
        %v724 = vsel %vm322, %v642, 0
        %v726 = vsel %vm322, %v643, 0
        %728 = vmatprep.subr.mxu0 %v691
        %729 = vmatpush1.msra.mxu0 %v690
        %730 = vmatprep.subr.mxu0 %v726
        %731 = vmatpush1.msra.mxu0 %v724
        %732 = vmatprep.subr.mxu0 0.0
        %733 = vmatpush1.msra.mxu0 0.0
        %734 = vmatprep.subr.mxu0 0.0
        %735 = vmatpush1.msra.mxu0 0.0
        %736 = vmatprep.subr.mxu0 0.0
        %737 = vmatpush1.msra.mxu0 0.0
        %738 = vmatprep.subr.mxu0 0.0
        %739 = vmatpush1.msra.mxu0 0.0
        %740 = vmatprep.subr.mxu0 0.0
        %741 = vmatpush1.msra.mxu0 0.0
        %742 = vmatprep.subr.mxu0 0.0
        %743 = vmatpush1.msra.mxu0 0.0
        %744 = vmatprep.subr.mxu0 0.0
        %745 = vmatpush1.msra.mxu0 0.0
        %746 = vmatprep.subr.mxu0 0.0
        %747 = vmatpush1.msra.mxu0 0.0
        %748 = vmatprep.subr.mxu0 0.0
        %749 = vmatpush1.msra.mxu0 0.0
        %750 = vmatprep.subr.mxu0 0.0
        %751 = vmatpush1.msra.mxu0 0.0
        %752 = vmatprep.subr.mxu0 0.0
        %753 = vmatpush1.msra.mxu0 0.0
        %754 = vmatprep.subr.mxu0 0.0
        %755 = vmatpush1.msra.mxu0 0.0
        %756 = vmatprep.subr.mxu0 0.0
        %757 = vmatpush1.msra.mxu0 0.0
        %758 = vmatprep.subr.mxu0 0.0
        %759 = vmatpush1.msra.mxu0 0.0
        %760 = vmatprep.subr.mxu0 0.0
        %761 = vmatpush1.msra.mxu0 0.0
        %762 = vmatprep.subr.mxu0 0.0
        %763 = vmatpush1.msra.mxu0 0.0
        %764 = vmatprep.subr.mxu0 0.0
        %765 = vmatpush1.msra.mxu0 0.0
        %766 = vmatprep.subr.mxu0 0.0
        %767 = vmatpush1.msra.mxu0 0.0
        %768 = vmatprep.subr.mxu0 0.0
        %769 = vmatpush1.msra.mxu0 0.0
        %770 = vmatprep.subr.mxu0 0.0
        %771 = vmatpush1.msra.mxu0 0.0
        %772 = vmatprep.subr.mxu0 0.0
        %773 = vmatpush1.msra.mxu0 0.0
        %774 = vmatprep.subr.mxu0 0.0
        %775 = vmatpush1.msra.mxu0 0.0
        %776 = vmatprep.subr.mxu0 0.0
        %777 = vmatpush1.msra.mxu0 0.0
        %778 = vmatprep.subr.mxu0 0.0
        %779 = vmatpush1.msra.mxu0 0.0
        %780 = vmatprep.subr.mxu0 0.0
        %781 = vmatpush1.msra.mxu0 0.0
        %782 = vmatprep.subr.mxu0 0.0
        %783 = vmatpush1.msra.mxu0 0.0
        %784 = vmatprep.subr.mxu0 0.0
        %785 = vmatpush1.msra.mxu0 0.0
        %786 = vmatprep.subr.mxu0 0.0
        %787 = vmatpush1.msra.mxu0 0.0
        %788 = vmatprep.subr.mxu0 0.0
        %789 = vmatpush1.msra.mxu0 0.0
        %790 = vmatprep.subr.mxu0 0.0
        %791 = vmatpush1.msra.mxu0 0.0
        %792 = vmatprep.mubr.f32.mxu0 0.0
        %793 = vmatmul.mubr.f32.gmra.mrb[0].mxu0 %v722
        %v794 = vpop.f32.mrb[0].mxu0
        %v795 = vadd.f32 0.0, %v794
        %v796 = vpop.f32.mrb[0].mxu0
        %v797 = vadd.f32 0.0, %v796
        %798 = vdwg.mxu0
        %v800 = vsel %vm359, %v718, 0
        %v803 = vsel %vm322, %v678, 0
        %v805 = vsel %vm322, %v676, 0
        %807 = vmatprep.subr.mxu0 %v685
        %808 = vmatpush1.msra.mxu0 %v684
        %809 = vmatprep.subr.mxu0 %v805
        %810 = vmatpush1.msra.mxu0 %v803
        %811 = vmatprep.subr.mxu0 0.0
        %812 = vmatpush1.msra.mxu0 0.0
        %813 = vmatprep.subr.mxu0 0.0
        %814 = vmatpush1.msra.mxu0 0.0
        %815 = vmatprep.subr.mxu0 0.0
        %816 = vmatpush1.msra.mxu0 0.0
        %817 = vmatprep.subr.mxu0 0.0
        %818 = vmatpush1.msra.mxu0 0.0
        %819 = vmatprep.subr.mxu0 0.0
        %820 = vmatpush1.msra.mxu0 0.0
        %821 = vmatprep.subr.mxu0 0.0
        %822 = vmatpush1.msra.mxu0 0.0
        %823 = vmatprep.subr.mxu0 0.0
        %824 = vmatpush1.msra.mxu0 0.0
        %825 = vmatprep.subr.mxu0 0.0
        %826 = vmatpush1.msra.mxu0 0.0
        %827 = vmatprep.subr.mxu0 0.0
        %828 = vmatpush1.msra.mxu0 0.0
        %829 = vmatprep.subr.mxu0 0.0
        %830 = vmatpush1.msra.mxu0 0.0
        %831 = vmatprep.subr.mxu0 0.0
        %832 = vmatpush1.msra.mxu0 0.0
        %833 = vmatprep.subr.mxu0 0.0
        %834 = vmatpush1.msra.mxu0 0.0
        %835 = vmatprep.subr.mxu0 0.0
        %836 = vmatpush1.msra.mxu0 0.0
        %837 = vmatprep.subr.mxu0 0.0
        %838 = vmatpush1.msra.mxu0 0.0
        %839 = vmatprep.subr.mxu0 0.0
        %840 = vmatpush1.msra.mxu0 0.0
        %841 = vmatprep.subr.mxu0 0.0
        %842 = vmatpush1.msra.mxu0 0.0
        %843 = vmatprep.subr.mxu0 0.0
        %844 = vmatpush1.msra.mxu0 0.0
        %845 = vmatprep.subr.mxu0 0.0
        %846 = vmatpush1.msra.mxu0 0.0
        %847 = vmatprep.subr.mxu0 0.0
        %848 = vmatpush1.msra.mxu0 0.0
        %849 = vmatprep.subr.mxu0 0.0
        %850 = vmatpush1.msra.mxu0 0.0
        %851 = vmatprep.subr.mxu0 0.0
        %852 = vmatpush1.msra.mxu0 0.0
        %853 = vmatprep.subr.mxu0 0.0
        %854 = vmatpush1.msra.mxu0 0.0
        %855 = vmatprep.subr.mxu0 0.0
        %856 = vmatpush1.msra.mxu0 0.0
        %857 = vmatprep.subr.mxu0 0.0
        %858 = vmatpush1.msra.mxu0 0.0
        %859 = vmatprep.subr.mxu0 0.0
        %860 = vmatpush1.msra.mxu0 0.0
        %861 = vmatprep.subr.mxu0 0.0
        %862 = vmatpush1.msra.mxu0 0.0
        %863 = vmatprep.subr.mxu0 0.0
        %864 = vmatpush1.msra.mxu0 0.0
        %865 = vmatprep.subr.mxu0 0.0
        %866 = vmatpush1.msra.mxu0 0.0
        %867 = vmatprep.subr.mxu0 0.0
        %868 = vmatpush1.msra.mxu0 0.0
        %869 = vmatprep.subr.mxu0 0.0
        %870 = vmatpush1.msra.mxu0 0.0
        %871 = vmatprep.mubr.f32.mxu0 0.0
        %872 = vmatmul.mubr.f32.gmra.mrb[0].mxu0 %v800
        %v873 = vpop.f32.mrb[0].mxu0
        %v874 = vadd.f32 %v795, %v873
        %v875 = vpop.f32.mrb[0].mxu0
        %v876 = vadd.f32 %v797, %v875
        %877 = vdwg.mxu0
        %s878 = scalar_lea.vmem [#allocation7], 8
        %v879 = vld [vmem:[%s878] sm:$0xf]
        %v881 = vsel %vm359, %v879, 0
        %v883 = vsel %vm322, %v707, 0
        %v886 = vsel %vm322, %v710, 0
        %888 = vmatprep.subr.mxu0 %v717
        %889 = vmatpush1.msra.mxu0 %v716
        %890 = vmatprep.subr.mxu0 %v886
        %891 = vmatpush1.msra.mxu0 %v883
        %892 = vmatprep.subr.mxu0 0.0
        %893 = vmatpush1.msra.mxu0 0.0
        %894 = vmatprep.subr.mxu0 0.0
        %895 = vmatpush1.msra.mxu0 0.0
        %896 = vmatprep.subr.mxu0 0.0
        %897 = vmatpush1.msra.mxu0 0.0
        %898 = vmatprep.subr.mxu0 0.0
        %899 = vmatpush1.msra.mxu0 0.0
        %900 = vmatprep.subr.mxu0 0.0
        %901 = vmatpush1.msra.mxu0 0.0
        %902 = vmatprep.subr.mxu0 0.0
        %903 = vmatpush1.msra.mxu0 0.0
        %904 = vmatprep.subr.mxu0 0.0
        %905 = vmatpush1.msra.mxu0 0.0
        %906 = vmatprep.subr.mxu0 0.0
        %907 = vmatpush1.msra.mxu0 0.0
        %908 = vmatprep.subr.mxu0 0.0
        %909 = vmatpush1.msra.mxu0 0.0
        %910 = vmatprep.subr.mxu0 0.0
        %911 = vmatpush1.msra.mxu0 0.0
        %912 = vmatprep.subr.mxu0 0.0
        %913 = vmatpush1.msra.mxu0 0.0
        %914 = vmatprep.subr.mxu0 0.0
        %915 = vmatpush1.msra.mxu0 0.0
        %916 = vmatprep.subr.mxu0 0.0
        %917 = vmatpush1.msra.mxu0 0.0
        %918 = vmatprep.subr.mxu0 0.0
        %919 = vmatpush1.msra.mxu0 0.0
        %920 = vmatprep.subr.mxu0 0.0
        %921 = vmatpush1.msra.mxu0 0.0
        %922 = vmatprep.subr.mxu0 0.0
        %923 = vmatpush1.msra.mxu0 0.0
        %924 = vmatprep.subr.mxu0 0.0
        %925 = vmatpush1.msra.mxu0 0.0
        %926 = vmatprep.subr.mxu0 0.0
        %927 = vmatpush1.msra.mxu0 0.0
        %928 = vmatprep.subr.mxu0 0.0
        %929 = vmatpush1.msra.mxu0 0.0
        %930 = vmatprep.subr.mxu0 0.0
        %931 = vmatpush1.msra.mxu0 0.0
        %932 = vmatprep.subr.mxu0 0.0
        %933 = vmatpush1.msra.mxu0 0.0
        %934 = vmatprep.subr.mxu0 0.0
        %935 = vmatpush1.msra.mxu0 0.0
        %936 = vmatprep.subr.mxu0 0.0
        %937 = vmatpush1.msra.mxu0 0.0
        %938 = vmatprep.subr.mxu0 0.0
        %939 = vmatpush1.msra.mxu0 0.0
        %940 = vmatprep.subr.mxu0 0.0
        %941 = vmatpush1.msra.mxu0 0.0
        %942 = vmatprep.subr.mxu0 0.0
        %943 = vmatpush1.msra.mxu0 0.0
        %944 = vmatprep.subr.mxu0 0.0
        %945 = vmatpush1.msra.mxu0 0.0
        %946 = vmatprep.subr.mxu0 0.0
        %947 = vmatpush1.msra.mxu0 0.0
        %948 = vmatprep.subr.mxu0 0.0
        %949 = vmatpush1.msra.mxu0 0.0
        %950 = vmatprep.subr.mxu0 0.0
        %951 = vmatpush1.msra.mxu0 0.0
        %952 = vmatprep.mubr.f32.mxu0 0.0
        %953 = vmatmul.mubr.f32.gmra.mrb[0].mxu0 %v881
        %v954 = vpop.f32.mrb[0].mxu0
        %v955 = vadd.f32 0.0, %v954
        %v956 = vpop.f32.mrb[0].mxu0
        %v957 = vadd.f32 0.0, %v956
        %958 = vdwg.mxu0
        %v959 = vadd.f32 %v874, %v955
        %v960 = vadd.f32 %v876, %v957
        %v961 = vsel %vm322, %v959, 0.0
        %v962 = vsel %vm322, %v960, 0.0
        %v963 = vadd.f32 %v961, %v962
        %964 = vadd.xlane.f32.xlu0 %v963
        %v965 = vpop.xlane.xlu0 %964
        %v966 = vmul.f32 %v965, 0.00390625
        %v967 = vsub.f32 %v959, %v966
        %v968 = vsub.f32 %v960, %v966
        %v969 = vmul.f32 %v967, %v967
        %v970 = vmul.f32 %v968, %v968
        %v971 = vsel %vm322, %v969, 0.0
        %v972 = vsel %vm322, %v970, 0.0
        %v973 = vadd.f32 %v971, %v972
        %974 = vadd.xlane.f32.xlu0 %v973
        %v975 = vpop.xlane.xlu0 %974
        %v976 = vmul.f32 %v975, 0.00390625
        %v977 = vadd.f32 %v976, 1e-05
        %v978 = vrsqrt.pop %v977
        %v979 = vmul.f32 %v967, %v978
        %v980 = vmul.f32 %v968, %v978
        %v983 = vcombine.low %v979, %v980
        %v985 = vadd.f32 %v216, %v983
        %986 = vst [vmem:[%s215] sm:$0xff] %v985
        %s987 = sand.u32 %s97, 1
        %s988 = scalar_lea.sflag [#allocation4], %s987
        %s989 = sand.u32 %s97, 1
        %s990 = smul.addr %s989, 8
        %s991 = scalar_lea.vmem [#allocation8], %s990
        // Predicated region
        $region45: #{tpu_custom_call.1} parent=31 // pred_check
          %p992 = pneg %p107
        $region46: #{tpu_custom_call.1} parent=31 // pred_check_branch
          %994 = sbr.rel (%p992) target = $region48
        $region47: #{tpu_custom_call.1} parent=31 // pred_region
          %s996 = ssub.s32 128, 128
          %997 = vsyncadd %s988, %s996
          %s998 = smul.addr %s21, 2
          %s999 = smul.addr %s998, 64
          %s1000 = scalar_lea.hbm %s3, %s999
          %s1002 = sshll.u32 %s991, 4
          %s1003 = int_to_ptr.vmem [resolvable:$true] %s1002
          %1005 = dma.vmem_to_hbm [thread:$0]  %s1003, 128, %s1000, %s988
        $region48: #{tpu_custom_call.1} parent=31 // pred_fallthru
          _
      $region32: #{tpu_custom_call.1} parent=5 // pred_fallthru
        _
      %p1006 = scmp.le.s32.totalorder 2, %s16
      // Predicated region
      $region49: #{tpu_custom_call.1} parent=5 // pred_check
        %p1007 = pneg %p1006
      $region50: #{tpu_custom_call.1} parent=5 // pred_check_branch
        %1009 = sbr.rel (%p1007) target = $region52
      $region51: #{tpu_custom_call.1} parent=5 // pred_region
        %s1010 = ssub.s32 %s16, 2
        // Predicated region
        $region53: #{tpu_custom_call.1} parent=51 // pred_check
          %p1011 = pneg %p113
        $region54: #{tpu_custom_call.1} parent=51 // pred_check_branch
          %1013 = sbr.rel (%p1011) target = $region56
        $region55: #{tpu_custom_call.1} parent=51 // pred_region
          %s1014 = sand.u32 %s98, 1
          %s1015 = scalar_lea.sflag [#allocation4], %s1014
          %s1016 = sand.u32 %s98, 1
          %s1017 = smul.addr %s1016, 8
          %s1018 = scalar_lea.vmem [#allocation8], %s1017
          %1019 = dma.done %s1015, 128
        $region56: #{tpu_custom_call.1} parent=51 // pred_fallthru
          _
      $region52: #{tpu_custom_call.1} parent=5 // pred_fallthru
        _
    $region6: #{tpu_custom_call.1} parent=1 // loop_footer
      %s20 = sadd.s32 1, %s16
    $region7: #{tpu_custom_call.1} parent=1 // loop_footer_branch
      %15 = sbr.rel target = $region3
    $region8: #{tpu_custom_call.1} parent=1 // loop_exit
      _
    %1020 = vsyncpa [#allocation3], 1
    %s1021 = scalar_lea.sflag [#allocation3], 1
    %1022 = vsyncpa %s1021, 1
    %1023 = vsyncpa [#allocation6], 1
    %1024 = vsyncpa [#allocation4], 1
    %s1025 = scalar_lea.sflag [#allocation4], 1
    %1026 = vsyncpa %s1025, 1

</llo_original>
